<compile_context>
chip_gen: v7x
topology: tpu7x:2x2x1
jax: 0.10.0
libtpu: 0.0.40
codegen_flags: <defaults>
</compile_context>

<pallas_src>
import functools

import jax
import jax.numpy as jnp
from jax.experimental import pallas as pl
from jax.experimental.pallas import tpu as pltpu


def _gconv_kernel(x_ref, gk_ref, w_ref, b_ref, o_ref, *,
                  ks, n, n_pad, tb, c_in, c_out, compute_dtype):
    """One (batch, time-block) grid step.

    x_ref : (1, c_in, TB, n)         input slab, original NCHW layout
    gk_ref: (n, ks*n_pad)            graph kernel, hop k in cols [k*n_pad, k*n_pad+n)
    w_ref : (ks, c_out*TB, c_in*TB)  per-hop theta weight  W_k (x) I_TB
    b_ref : (c_out, 1, 1)            Linear bias (f32)
    o_ref : (1, c_out, TB, n)        output slab, original NCHW layout
    """
    # (c_in, TB, n) -> (c_in*TB, n): free leading-dim merge (TB % 8 == 0).
    x2 = x_ref[0].reshape(c_in * tb, n).astype(compute_dtype)

    # Graph matmul, contraction over the node axis (f32 accumulation on MXU).
    xk = jnp.dot(x2, gk_ref[...], preferred_element_type=jnp.float32)
    xk = xk.astype(compute_dtype)                    # (c_in*TB, ks*n_pad)

    # Per-hop theta accumulation.  Each product has rows already ordered
    # (c_out, t), so no transpose / regroup is needed before the store.
    acc = jnp.zeros((c_out * tb, n_pad), jnp.float32)
    for k in range(ks):                              # ks static & small -> unrolled
        blk = xk[:, k * n_pad:(k + 1) * n_pad]       # free 128-aligned lane slice
        acc = acc + jnp.dot(w_ref[k], blk, preferred_element_type=jnp.float32)

    out = acc.reshape(c_out, tb, n_pad) + b_ref[...]  # free row split + bias bcast
    o_ref[0] = out[:, :, :n].astype(o_ref.dtype)


def _pick_time_block(T, B, c_in, c_out, tb_max):
    """Multiple-of-8 divisor of T, sized to balance MXU fill vs. Kronecker
    waste, preferring >= 4 grid steps so both v7x TensorCores get work."""
    if T % 8 != 0:
        # Correctness fallback: full-extent time block (sublane-masked stores
        # and non-free reshapes; fine for small T).
        return T
    cmax = max(c_in, c_out, 1)
    cap = max(8, min(tb_max, (512 // cmax) // 8 * 8, T))
    cands = [d for d in range(8, cap + 1, 8) if T % d == 0]  # 8 always qualifies
    for tb in sorted(cands, reverse=True):
        if B * (T // tb) >= 4:
            return tb
    return max(cands)


def gconv_forward(x, graph_kernel, weight, bias, ks, *,
                  tb_max=128, compute_dtype=jnp.bfloat16):
    """Pallas implementation of GConv.forward.

    x:            (B, c_in, T, n)
    graph_kernel: (n, ks*n)
    weight:       (c_out, ks*c_in)   torch Linear layout, feature f = ci*ks + k
    bias:         (c_out,)
    returns       (B, c_out, T, n)
    """
    B, c_in, T, n = x.shape
    c_out = weight.shape[0]
    assert graph_kernel.shape == (n, ks * n), graph_kernel.shape
    assert weight.shape == (c_out, ks * c_in), weight.shape

    n_pad = ((n + 127) // 128) * 128
    tb = _pick_time_block(T, B, c_in, c_out, tb_max)

    # Graph kernel: zero-pad each hop's column block to n_pad so in-kernel hop
    # slices are free 128-aligned lane slices.  x itself is NOT padded.
    gk = jnp.pad(graph_kernel.reshape(n, ks, n),
                 ((0, 0), (0, 0), (0, n_pad - n)))
    gk = gk.reshape(n, ks * n_pad).astype(compute_dtype)

    # theta weight W[co, ci*ks + k]  ->  per-hop  W_k (x) I_TB, so each hop is a
    # single rank-2 matmul producing rows in (c_out, t) order directly.
    w_perm = weight.reshape(c_out, c_in, ks).transpose(2, 0, 1)   # (ks, co, ci)
    eye = jnp.eye(tb, dtype=weight.dtype)
    w_kron = jnp.einsum("kab,ij->kaibj", w_perm, eye)
    w_kron = w_kron.reshape(ks, c_out * tb, c_in * tb).astype(compute_dtype)

    b_arr = bias.astype(jnp.float32).reshape(c_out, 1, 1)

    grid = (B, T // tb)

    # VMEM budget: resident gk / expanded weight, double-buffered x/out tiles,
    # plus in-kernel intermediates; capped well below physical VMEM on v7x.
    cdt = jnp.dtype(compute_dtype).itemsize
    xdt = jnp.dtype(x.dtype).itemsize
    est = (n * ks * n_pad * cdt
           + ks * (c_out * tb) * (c_in * tb) * cdt
           + 2 * c_in * tb * n * xdt
           + 2 * c_out * tb * n * xdt
           + c_in * tb * ks * n_pad * (4 + cdt)
           + 2 * c_out * tb * n_pad * 4)
    try:
        cap = int(pltpu.get_tpu_info().vmem_capacity_bytes * 3 // 4)
    except Exception:
        cap = 48 * 1024 * 1024
    vmem_limit = int(min(max(2 * est + (4 << 20), 32 << 20), cap))

    kern = functools.partial(_gconv_kernel, ks=ks, n=n, n_pad=n_pad, tb=tb,
                             c_in=c_in, c_out=c_out,
                             compute_dtype=compute_dtype)

    out = pl.pallas_call(
        kern,
        out_shape=jax.ShapeDtypeStruct((B, c_out, T, n), x.dtype),
        grid_spec=pltpu.PrefetchScalarGridSpec(
            num_scalar_prefetch=0,
            grid=grid,
            in_specs=[
                # x tile read directly from the (B, c_in, T, n) layout.
                pl.BlockSpec((1, c_in, tb, n), lambda b, t: (b, 0, t, 0)),
                # Grid-invariant operands (constant index_map -> DMA'd once).
                pl.BlockSpec((n, ks * n_pad), lambda b, t: (0, 0)),
                pl.BlockSpec((ks, c_out * tb, c_in * tb),
                             lambda b, t: (0, 0, 0)),
                pl.BlockSpec((c_out, 1, 1), lambda b, t: (0, 0, 0)),
            ],
            # Output written directly in the (B, c_out, T, n) layout.
            out_specs=pl.BlockSpec((1, c_out, tb, n),
                                   lambda b, t: (b, 0, t, 0)),
        ),
        compiler_params=pltpu.CompilerParams(
            dimension_semantics=("parallel", "parallel"),
            vmem_limit_bytes=vmem_limit),
    )(x, gk, w_kron, b_arr)
    return out


def gconv_reference(x, graph_kernel, weight, bias, ks, c_in):
    """Pure-JAX transcription of the PyTorch forward, for validation."""
    B, _, T, n = x.shape
    x_tmp = jnp.transpose(x, (0, 2, 1, 3))                 # (B, T, c_in, n)
    x_ker = jnp.matmul(x_tmp, graph_kernel)                # (B, T, c_in, ks*n)
    x_ker = x_ker.reshape(-1, T, c_in * ks, n)
    x_ker = jnp.transpose(x_ker, (0, 1, 3, 2))             # (B, T, n, c_in*ks)
    x_fig = jnp.matmul(x_ker, weight.T) + bias             # (B, T, n, c_out)
    return jnp.transpose(x_fig, (0, 3, 1, 2))              # (B, c_out, T, n)


if __name__ == "__main__":
    B, c_in, c_out, T, n, ks = 2, 4, 8, 8, 16, 3

    key = jax.random.PRNGKey(0)
    kx, kg, kw, kb = jax.random.split(key, 4)

    x = jax.random.normal(kx, (B, c_in, T, n), dtype=jnp.float32)
    graph_kernel = jax.random.normal(kg, (n, ks * n), dtype=jnp.float32) * 0.2
    # nn.Linear(ks*c_in, c_out): weight (c_out, ks*c_in), bias (c_out,)
    weight = jax.random.normal(kw, (c_out, ks * c_in), dtype=jnp.float32) * 0.1
    bias = jax.random.normal(kb, (c_out,), dtype=jnp.float32) * 0.1

    ref = gconv_reference(x, graph_kernel, weight, bias, ks, c_in)

    # f32-operand path: tight check against the pure-JAX reference.
    out_f32 = jax.block_until_ready(
        gconv_forward(x, graph_kernel, weight, bias, ks,
                      compute_dtype=jnp.float32))
    assert out_f32.shape == (B, c_out, T, n), out_f32.shape
    err_f32 = float(jnp.max(jnp.abs(out_f32 - ref)))
    assert jnp.allclose(out_f32, ref, rtol=1e-3, atol=2e-3), err_f32

    # bf16-operand / f32-accumulate path (default): explicit precision choice,
    # looser tolerance covers the bf16 input rounding.
    out_bf16 = jax.block_until_ready(
        gconv_forward(x, graph_kernel, weight, bias, ks))
    assert out_bf16.shape == (B, c_out, T, n), out_bf16.shape
    err_bf16 = float(jnp.max(jnp.abs(out_bf16 - ref)))
    assert jnp.allclose(out_bf16, ref, rtol=2e-2, atol=2e-2), err_bf16

    print("KERNEL_OK")
</pallas_src>

<mosaic_0001>
module attributes {stable_mosaic.version = 11 : i64} {
  func.func @_gconv_kernel(%arg0: i32, %arg1: i32, %arg2: memref<1x4x8x16xf32, #tpu.memory_space<vmem>>, %arg3: memref<16x384xf32, #tpu.memory_space<vmem>>, %arg4: memref<3x64x32xf32, #tpu.memory_space<vmem>>, %arg5: memref<8x1x1xf32, #tpu.memory_space<vmem>>, %arg6: memref<1x8x8x16xf32, #tpu.memory_space<vmem>>) attributes {dimension_semantics = [#tpu.dimension_semantics<parallel>, #tpu.dimension_semantics<parallel>], iteration_bounds = array<i64: 2, 1>, scalar_prefetch = 0 : i64, scratch_operands = 0 : i64, tpu.core_type = #tpu.core_type<tc>, window_params = [{transform_indices = @transform_0, window_bounds = array<i64: 1, 4, 8, 16>}, {pipeline_mode = #tpu.pipeline_mode<synchronous>, transform_indices = @transform_1, window_bounds = array<i64: 16, 384>}, {pipeline_mode = #tpu.pipeline_mode<synchronous>, transform_indices = @transform_2, window_bounds = array<i64: 3, 64, 32>}, {pipeline_mode = #tpu.pipeline_mode<synchronous>, transform_indices = @transform_3, window_bounds = array<i64: 8, 1, 1>}, {transform_indices = @transform_4, window_bounds = array<i64: 1, 8, 8, 16>}]} {
    %c0 = arith.constant 0 : index
    %c0_0 = arith.constant 0 : index
    %c0_1 = arith.constant 0 : index
    %c0_2 = arith.constant 0 : index
    %0 = vector.load %arg2[%c0, %c0_0, %c0_1, %c0_2] : memref<1x4x8x16xf32, #tpu.memory_space<vmem>>, vector<1x4x8x16xf32>
    %1 = vector.shape_cast %0 : vector<1x4x8x16xf32> to vector<4x8x16xf32>
    %2 = vector.shape_cast %1 : vector<4x8x16xf32> to vector<32x16xf32>
    %c0_3 = arith.constant 0 : index
    %c0_4 = arith.constant 0 : index
    %3 = vector.load %arg3[%c0_3, %c0_4] : memref<16x384xf32, #tpu.memory_space<vmem>>, vector<16x384xf32>
    %cst = arith.constant dense<0.000000e+00> : vector<32x384xf32>
    %4 = tpu.matmul %2, %3, %cst {dimension_numbers = #tpu.dot_dimension_numbers<[1], [0], [0], [1], [0, 0, 1, 1], [], []>} : vector<32x16xf32>, vector<16x384xf32>, vector<32x384xf32> -> vector<32x384xf32>
    %cst_5 = arith.constant 0.000000e+00 : f32
    %5 = vector.broadcast %cst_5 : f32 to vector<64x128xf32>
    %6 = vector.extract_strided_slice %4 {offsets = [0, 0], sizes = [32, 128], strides = [1, 1]} : vector<32x384xf32> to vector<32x128xf32>
    %c0_6 = arith.constant 0 : index
    %c0_7 = arith.constant 0 : index
    %c0_8 = arith.constant 0 : index
    %7 = vector.load %arg4[%c0_6, %c0_7, %c0_8] : memref<3x64x32xf32, #tpu.memory_space<vmem>>, vector<1x64x32xf32>
    %8 = vector.shape_cast %7 : vector<1x64x32xf32> to vector<64x32xf32>
    %cst_9 = arith.constant dense<0.000000e+00> : vector<64x128xf32>
    %9 = tpu.matmul %8, %6, %cst_9 {dimension_numbers = #tpu.dot_dimension_numbers<[1], [0], [0], [1], [0, 0, 1, 1], [], []>} : vector<64x32xf32>, vector<32x128xf32>, vector<64x128xf32> -> vector<64x128xf32>
    %10 = arith.addf %5, %9 : vector<64x128xf32>
    %11 = vector.extract_strided_slice %4 {offsets = [0, 128], sizes = [32, 128], strides = [1, 1]} : vector<32x384xf32> to vector<32x128xf32>
    %c1 = arith.constant 1 : index
    %c0_10 = arith.constant 0 : index
    %c0_11 = arith.constant 0 : index
    %12 = vector.load %arg4[%c1, %c0_10, %c0_11] : memref<3x64x32xf32, #tpu.memory_space<vmem>>, vector<1x64x32xf32>
    %13 = vector.shape_cast %12 : vector<1x64x32xf32> to vector<64x32xf32>
    %cst_12 = arith.constant dense<0.000000e+00> : vector<64x128xf32>
    %14 = tpu.matmul %13, %11, %cst_12 {dimension_numbers = #tpu.dot_dimension_numbers<[1], [0], [0], [1], [0, 0, 1, 1], [], []>} : vector<64x32xf32>, vector<32x128xf32>, vector<64x128xf32> -> vector<64x128xf32>
    %15 = arith.addf %10, %14 : vector<64x128xf32>
    %16 = vector.extract_strided_slice %4 {offsets = [0, 256], sizes = [32, 128], strides = [1, 1]} : vector<32x384xf32> to vector<32x128xf32>
    %c2 = arith.constant 2 : index
    %c0_13 = arith.constant 0 : index
    %c0_14 = arith.constant 0 : index
    %17 = vector.load %arg4[%c2, %c0_13, %c0_14] : memref<3x64x32xf32, #tpu.memory_space<vmem>>, vector<1x64x32xf32>
    %18 = vector.shape_cast %17 : vector<1x64x32xf32> to vector<64x32xf32>
    %cst_15 = arith.constant dense<0.000000e+00> : vector<64x128xf32>
    %19 = tpu.matmul %18, %16, %cst_15 {dimension_numbers = #tpu.dot_dimension_numbers<[1], [0], [0], [1], [0, 0, 1, 1], [], []>} : vector<64x32xf32>, vector<32x128xf32>, vector<64x128xf32> -> vector<64x128xf32>
    %20 = arith.addf %15, %19 : vector<64x128xf32>
    %21 = vector.shape_cast %20 : vector<64x128xf32> to vector<8x8x128xf32>
    %c0_16 = arith.constant 0 : index
    %c0_17 = arith.constant 0 : index
    %c0_18 = arith.constant 0 : index
    %22 = vector.load %arg5[%c0_16, %c0_17, %c0_18] : memref<8x1x1xf32, #tpu.memory_space<vmem>>, vector<8x1x1xf32>
    %23 = vector.broadcast %22 : vector<8x1x1xf32> to vector<8x8x128xf32>
    %24 = arith.addf %21, %23 : vector<8x8x128xf32>
    %25 = vector.extract_strided_slice %24 {offsets = [0, 0, 0], sizes = [8, 8, 16], strides = [1, 1, 1]} : vector<8x8x128xf32> to vector<8x8x16xf32>
    %c0_19 = arith.constant 0 : index
    %c0_20 = arith.constant 0 : index
    %c0_21 = arith.constant 0 : index
    %c0_22 = arith.constant 0 : index
    %26 = vector.load %arg6[%c0_19, %c0_20, %c0_21, %c0_22] : memref<1x8x8x16xf32, #tpu.memory_space<vmem>>, vector<1x8x8x16xf32>
    %27 = vector.shape_cast %26 : vector<1x8x8x16xf32> to vector<8x8x16xf32>
    %28 = vector.shape_cast %25 : vector<8x8x16xf32> to vector<1x8x8x16xf32>
    tpu.vector_store %arg6[%c0_19, %c0_20, %c0_21, %c0_22], %28 {strides = array<i32>} : memref<1x8x8x16xf32, #tpu.memory_space<vmem>>, vector<1x8x8x16xf32>,
    return
  }
  func.func @transform_0(%arg0: i32, %arg1: i32) -> (i32, i32, i32, i32) {
    %c0_i32 = arith.constant 0 : i32
    %c0_i32_0 = arith.constant 0 : i32
    %c0_i32_1 = arith.constant 0 : i32
    return %arg0, %c0_i32, %arg1, %c0_i32_0 : i32, i32, i32, i32
  }
  func.func @transform_1(%arg0: i32, %arg1: i32) -> (i32, i32) {
    %c0_i32 = arith.constant 0 : i32
    %c0_i32_0 = arith.constant 0 : i32
    %c0_i32_1 = arith.constant 0 : i32
    return %c0_i32, %c0_i32_0 : i32, i32
  }
  func.func @transform_2(%arg0: i32, %arg1: i32) -> (i32, i32, i32) {
    %c0_i32 = arith.constant 0 : i32
    %c0_i32_0 = arith.constant 0 : i32
    %c0_i32_1 = arith.constant 0 : i32
    %c0_i32_2 = arith.constant 0 : i32
    return %c0_i32, %c0_i32_0, %c0_i32_1 : i32, i32, i32
  }
  func.func @transform_3(%arg0: i32, %arg1: i32) -> (i32, i32, i32) {
    %c0_i32 = arith.constant 0 : i32
    %c0_i32_0 = arith.constant 0 : i32
    %c0_i32_1 = arith.constant 0 : i32
    %c0_i32_2 = arith.constant 0 : i32
    return %c0_i32, %c0_i32_0, %c0_i32_1 : i32, i32, i32
  }
  func.func @transform_4(%arg0: i32, %arg1: i32) -> (i32, i32, i32, i32) {
    %c0_i32 = arith.constant 0 : i32
    %c0_i32_0 = arith.constant 0 : i32
    %c0_i32_1 = arith.constant 0 : i32
    return %arg0, %c0_i32, %arg1, %c0_i32_0 : i32, i32, i32, i32
  }
}

</mosaic_0001>

<llo_original>
// kernel: tpu_custom_call.1
$region0: #{tpu_custom_call.1}
  #allocation0 [shape = 'u32[]', space=smem, size = 0x4, offset = 0x4, fixed_abs, tag = 'smem constant byte address 0x4 - core index']
  #allocation1 [shape = 'u32[144,128]{1,0:T(1,128)}', space=vmem, size = 0x12000, scoped, tag = 'internal scratch']
  %s0 = inlined_call_operand.vmem [shape: f32[2,4,8,16], index: 0, kind: input, shape index: {}]
  %s1 = inlined_call_operand.vmem [shape: f32[16,384], index: 1, kind: input, shape index: {}]
  %s2 = inlined_call_operand.vmem [shape: f32[3,64,32], index: 2, kind: input, shape index: {}]
  %s3 = inlined_call_operand.vmem [shape: f32[8,1,1], index: 3, kind: input, shape index: {}]
  %s4 = inlined_call_operand.hbm [shape: f32[2,8,8,16], index: 4, kind: output, shape index: {}]
  %s5 = sld [smem:[#allocation0]]
  $region49: #{tpu_custom_call.1} parent=0
    _
  %s7 = ssub.s32 1, %s5
  %s8 = scalar_select 0, %s7, %s5
  $region1: #{tpu_custom_call.1} parent=0
    #allocation2 [shape = 'u8[65536]{0}', space=vmem, size = 0x10000, scoped, tag = 'output window, operand 0']
    #allocation3 [shape = 's32[2]{0}', space=sflag, size = 0x8, scoped, tag = 'scoped memory for tpu_custom_call.1']
    %9 = vsyncpa [#allocation3], 0
    %s10 = scalar_lea.sflag [#allocation3], 1
    %11 = vsyncpa %s10, 0
    loop: start=0, step=1, limit=4
    $region2: #{tpu_custom_call.1} parent=1 // loop_pre_header
      _
    $region3: #{tpu_custom_call.1} parent=1 // loop_header
      %s13 = sphi 0, %s17
      %p14 = scmp.ge.s32.totalorder %s13, 4
      %s20 = sphi 0, %s32
      %s21 = sphi 0, %s28
      %s22 = sphi 0, %s20
      %s23 = sphi 0, %s21
      %s24 = sphi 0, %s22
      %s25 = sphi 0, %s23
      %s37 = sphi 0, %s39
      %s40 = sphi 0, %s37
      %s41 = sphi 0, %s40
      %s57 = sphi 0, %s41
      %s61 = sphi 0, %s61
      %s63 = sphi 0, %s61
      %s64 = sphi 0, %s63
      %s78 = sphi 0, %s64
      %s82 = sphi 0, %s82
      %s84 = sphi 0, %s82
      %s85 = sphi 0, %s84
      %s99 = sphi 0, %s85
      %s103 = sphi 0, %s103
      %s105 = sphi 0, %s103
      %s106 = sphi 0, %s105
      %s120 = sphi 0, %s106
      %s128 = sphi 0, %s130
      %s131 = sphi 0, %s128
      %s132 = sphi 0, %s131
      %s148 = sphi 0, %s132
    $region4: #{tpu_custom_call.1} parent=1 // loop_header_branch
      %16 = sbr.rel (%p14) target = $region8
    $region5: #{tpu_custom_call.1} parent=1 // loop_body
      %s18 = ssub.s32 %s13, 1
      %s19 = ssub.s32 %s13, 2
      %s26 = sadd.s32 1, %s21
      %p27 = scmp.ge.s32.totalorder %s26, 1
      %s28 = scalar_select %p27, 0, %s26
      %s29 = sadd.s32 1, %s20
      %s30 = scalar_select %p27, %s29, %s20
      %p31 = scmp.ge.s32.totalorder %s30, 2
      %s32 = scalar_select %p31, 0, %s30
      %s33 = ssub.s32 %s20, %s32
      %s34 = ssub.s32 %s21, %s28
      %s35 = sor.u32 %s33, %s34
      %p36 = scmp.eq.s32.totalorder %s35, 0
      %s38 = sadd.s32 %s37, 1
      %s39 = scalar_select %p36, %s37, %s38
      %p42 = pneg %p36
      %p43 = scmp.eq.s32.totalorder %s13, 1
      %p44 = por %p42, %p43
      %p45 = scmp.ne.s32.totalorder %s37, %s40
      %p46 = scmp.eq.s32.totalorder %s13, 0
      %p47 = por %p45, %p46
      %p48 = scmp.ne.s32.totalorder %s37, %s40
      %p49 = scmp.eq.s32.totalorder %s18, 1
      %p50 = por %p48, %p49
      %p51 = scmp.ne.s32.totalorder %s40, %s41
      %p52 = scmp.eq.s32.totalorder %s18, 0
      %p53 = por %p51, %p52
      %p54 = scmp.ne.s32.totalorder %s40, %s41
      %p55 = scmp.eq.s32.totalorder %s19, 1
      %p56 = por %p54, %p55
      %p58 = scmp.ne.s32.totalorder %s41, %s57
      %p59 = scmp.eq.s32.totalorder %s19, 0
      %p60 = por %p58, %p59
      %s62 = sadd.s32 %s61, 1
      %p65 = scmp.eq.s32.totalorder %s13, 1
      %p66 = scmp.ne.s32.totalorder %s61, %s63
      %p67 = scmp.eq.s32.totalorder %s13, 0
      %p68 = por %p66, %p67
      %p69 = scmp.ne.s32.totalorder %s61, %s63
      %p70 = scmp.eq.s32.totalorder %s18, 1
      %p71 = por %p69, %p70
      %p72 = scmp.ne.s32.totalorder %s63, %s64
      %p73 = scmp.eq.s32.totalorder %s18, 0
      %p74 = por %p72, %p73
      %p75 = scmp.ne.s32.totalorder %s63, %s64
      %p76 = scmp.eq.s32.totalorder %s19, 1
      %p77 = por %p75, %p76
      %p79 = scmp.ne.s32.totalorder %s64, %s78
      %p80 = scmp.eq.s32.totalorder %s19, 0
      %p81 = por %p79, %p80
      %s83 = sadd.s32 %s82, 1
      %p86 = scmp.eq.s32.totalorder %s13, 1
      %p87 = scmp.ne.s32.totalorder %s82, %s84
      %p88 = scmp.eq.s32.totalorder %s13, 0
      %p89 = por %p87, %p88
      %p90 = scmp.ne.s32.totalorder %s82, %s84
      %p91 = scmp.eq.s32.totalorder %s18, 1
      %p92 = por %p90, %p91
      %p93 = scmp.ne.s32.totalorder %s84, %s85
      %p94 = scmp.eq.s32.totalorder %s18, 0
      %p95 = por %p93, %p94
      %p96 = scmp.ne.s32.totalorder %s84, %s85
      %p97 = scmp.eq.s32.totalorder %s19, 1
      %p98 = por %p96, %p97
      %p100 = scmp.ne.s32.totalorder %s85, %s99
      %p101 = scmp.eq.s32.totalorder %s19, 0
      %p102 = por %p100, %p101
      %s104 = sadd.s32 %s103, 1
      %p107 = scmp.eq.s32.totalorder %s13, 1
      %p108 = scmp.ne.s32.totalorder %s103, %s105
      %p109 = scmp.eq.s32.totalorder %s13, 0
      %p110 = por %p108, %p109
      %p111 = scmp.ne.s32.totalorder %s103, %s105
      %p112 = scmp.eq.s32.totalorder %s18, 1
      %p113 = por %p111, %p112
      %p114 = scmp.ne.s32.totalorder %s105, %s106
      %p115 = scmp.eq.s32.totalorder %s18, 0
      %p116 = por %p114, %p115
      %p117 = scmp.ne.s32.totalorder %s105, %s106
      %p118 = scmp.eq.s32.totalorder %s19, 1
      %p119 = por %p117, %p118
      %p121 = scmp.ne.s32.totalorder %s106, %s120
      %p122 = scmp.eq.s32.totalorder %s19, 0
      %p123 = por %p121, %p122
      %s124 = ssub.s32 %s20, %s32
      %s125 = ssub.s32 %s21, %s28
      %s126 = sor.u32 %s124, %s125
      %p127 = scmp.eq.s32.totalorder %s126, 0
      %s129 = sadd.s32 %s128, 1
      %s130 = scalar_select %p127, %s128, %s129
      %p133 = pneg %p127
      %p134 = scmp.eq.s32.totalorder %s13, 1
      %p135 = por %p133, %p134
      %p136 = scmp.ne.s32.totalorder %s128, %s131
      %p137 = scmp.eq.s32.totalorder %s13, 0
      %p138 = por %p136, %p137
      %p139 = scmp.ne.s32.totalorder %s128, %s131
      %p140 = scmp.eq.s32.totalorder %s18, 1
      %p141 = por %p139, %p140
      %p142 = scmp.ne.s32.totalorder %s131, %s132
      %p143 = scmp.eq.s32.totalorder %s18, 0
      %p144 = por %p142, %p143
      %p145 = scmp.ne.s32.totalorder %s131, %s132
      %p146 = scmp.eq.s32.totalorder %s19, 1
      %p147 = por %p145, %p146
      %p149 = scmp.ne.s32.totalorder %s132, %s148
      %p150 = scmp.eq.s32.totalorder %s19, 0
      %p151 = por %p149, %p150
      %p152 = scmp.le.s32.totalorder 1, %s13
      %p153 = scmp.lt.s32.totalorder %s13, 3
      %p154 = pnand %p152, %p153
      %p155 = pneg %p154
      // Predicated region
      $region9: #{tpu_custom_call.1} parent=5 // pred_check
        _
      $region10: #{tpu_custom_call.1} parent=5 // pred_check_branch
        %157 = sbr.rel (%p154) target = $region12
      $region11: #{tpu_custom_call.1} parent=5 // pred_region
        %s158 = ssub.s32 %s13, 1
        // Predicated region
        $region13: #{tpu_custom_call.1} parent=11 // pred_check
          %p159 = pneg %p74
        $region14: #{tpu_custom_call.1} parent=11 // pred_check_branch
          %161 = sbr.rel (%p159) target = $region16
        $region15: #{tpu_custom_call.1} parent=11 // pred_region
          _
        $region16: #{tpu_custom_call.1} parent=11 // pred_fallthru
          _
        // Predicated region
        $region17: #{tpu_custom_call.1} parent=11 // pred_check
          %p162 = pneg %p95
        $region18: #{tpu_custom_call.1} parent=11 // pred_check_branch
          %164 = sbr.rel (%p162) target = $region20
        $region19: #{tpu_custom_call.1} parent=11 // pred_region
          _
        $region20: #{tpu_custom_call.1} parent=11 // pred_fallthru
          _
        // Predicated region
        $region21: #{tpu_custom_call.1} parent=11 // pred_check
          %p165 = pneg %p116
        $region22: #{tpu_custom_call.1} parent=11 // pred_check_branch
          %167 = sbr.rel (%p165) target = $region24
        $region23: #{tpu_custom_call.1} parent=11 // pred_region
          _
        $region24: #{tpu_custom_call.1} parent=11 // pred_fallthru
          _
      $region12: #{tpu_custom_call.1} parent=5 // pred_fallthru
        _
      %p168 = scmp.lt.s32.totalorder %s13, 2
      // Predicated region
      $region25: #{tpu_custom_call.1} parent=5 // pred_check
        %p169 = pneg %p168
      $region26: #{tpu_custom_call.1} parent=5 // pred_check_branch
        %171 = sbr.rel (%p169) target = $region28
      $region27: #{tpu_custom_call.1} parent=5 // pred_region
        // Predicated region
        $region29: #{tpu_custom_call.1} parent=27 // pred_check
          %p172 = pneg %p47
        $region30: #{tpu_custom_call.1} parent=27 // pred_check_branch
          %174 = sbr.rel (%p172) target = $region32
        $region31: #{tpu_custom_call.1} parent=27 // pred_region
          %p175 = scmp.lt.s32.totalorder %s20, 1
          %s176 = scalar_select %p175, %s20, 1
          %p177 = scmp.lt.s32.totalorder %s21, 0
          %s178 = scalar_select %p177, %s21, 0
          %s179 = smul.addr %s176, 4
          %s180 = sadd.s32 %s178, %s179
          %s181 = smul.addr %s180, 8
          %s182 = scalar_lea.vmem %s0, %s181
        $region32: #{tpu_custom_call.1} parent=27 // pred_fallthru
          _
      $region28: #{tpu_custom_call.1} parent=5 // pred_fallthru
        _
      %p183 = scmp.le.s32.totalorder 1, %s13
      %p184 = scmp.lt.s32.totalorder %s13, 3
      %p185 = pnand %p183, %p184
      %p186 = pneg %p185
      // Predicated region
      $region33: #{tpu_custom_call.1} parent=5 // pred_check
        _
      $region34: #{tpu_custom_call.1} parent=5 // pred_check_branch
        %188 = sbr.rel (%p185) target = $region36
      $region35: #{tpu_custom_call.1} parent=5 // pred_region
        %s189 = ssub.s32 %s13, 1
        %p190 = scmp.lt.s32.totalorder %s22, 1
        %s191 = scalar_select %p190, %s22, 1
        %p192 = scmp.lt.s32.totalorder %s23, 0
        %s193 = scalar_select %p192, %s23, 0
        %s194 = smul.addr %s191, 4
        %s195 = sadd.s32 %s193, %s194
        %s196 = smul.addr %s195, 8
        %s197 = scalar_lea.vmem %s0, %s196
        %p198 = pneg %p53
        %p199 = pneg %p50
        %p200 = pneg %p74
        %p201 = pneg %p71
        %p202 = pneg %p95
        %p203 = pneg %p92
        %p204 = pneg %p116
        %p205 = pneg %p113
        %p206 = pneg %p144
        %p207 = pneg %p141
        %s208 = sand.u32 %s131, 1
        %s209 = scalar_lea.sflag [#allocation3], %s208
        %s210 = sand.u32 %s131, 1
        %s211 = smul.addr %s210, 64
        %s212 = scalar_lea.vmem [#allocation2], %s211
        %p213 = scmp.lt.s32.totalorder %s22, 1
        %s214 = scalar_select %p213, %s22, 1
        %p215 = scmp.lt.s32.totalorder %s23, 0
        %s216 = scalar_select %p215, %s23, 0
        %s217 = smul.addr %s214, 4
        %s218 = sadd.s32 %s216, %s217
        %s219 = smul.addr %s218, 8
        %s220 = scalar_lea.vmem %s0, %s219
        %v221 = vld [vmem:[%s220] sm:$0xff]
        %v222 = vld [vmem:[%s220 + $0x8] sm:$0xff]
        %v223 = vld [vmem:[%s220 + $0x10] sm:$0xff]
        %v224 = vld [vmem:[%s220 + $0x18] sm:$0xff]
        %v225 = vld [vmem:[%s1] sm:$0xff]
        %v226 = vld [vmem:[%s1 + $0x8] sm:$0xff]
        %v227 = vld [vmem:[%s1 + $0x10] sm:$0xff]
        %v228 = vld [vmem:[%s1 + $0x18] sm:$0xff]
        %v229 = vld [vmem:[%s1 + $0x20] sm:$0xff]
        %v230 = vld [vmem:[%s1 + $0x28] sm:$0xff]
        %vm231 = vcmask 130048
        %v233 = vsel %vm231, %v221, 0
        %v236 = vsel %vm231, %v222, 0
        %v239 = vsel %vm231, %v223, 0
        %v242 = vsel %vm231, %v224, 0
        %244 = vmatprep.subr.mxu0 %v226
        %245 = vmatpush1.msra.mxu0 %v225
        %246 = vmatprep.subr.mxu0 %v229
        %247 = vmatpush1.msra.mxu0 %v228
        %248 = vmatprep.subr.mxu0 0.0
        %249 = vmatpush1.msra.mxu0 0.0
        %250 = vmatprep.subr.mxu0 0.0
        %251 = vmatpush1.msra.mxu0 0.0
        %252 = vmatprep.subr.mxu0 0.0
        %253 = vmatpush1.msra.mxu0 0.0
        %254 = vmatprep.subr.mxu0 0.0
        %255 = vmatpush1.msra.mxu0 0.0
        %256 = vmatprep.subr.mxu0 0.0
        %257 = vmatpush1.msra.mxu0 0.0
        %258 = vmatprep.subr.mxu0 0.0
        %259 = vmatpush1.msra.mxu0 0.0
        %260 = vmatprep.subr.mxu0 0.0
        %261 = vmatpush1.msra.mxu0 0.0
        %262 = vmatprep.subr.mxu0 0.0
        %263 = vmatpush1.msra.mxu0 0.0
        %264 = vmatprep.subr.mxu0 0.0
        %265 = vmatpush1.msra.mxu0 0.0
        %266 = vmatprep.subr.mxu0 0.0
        %267 = vmatpush1.msra.mxu0 0.0
        %268 = vmatprep.subr.mxu0 0.0
        %269 = vmatpush1.msra.mxu0 0.0
        %270 = vmatprep.subr.mxu0 0.0
        %271 = vmatpush1.msra.mxu0 0.0
        %272 = vmatprep.subr.mxu0 0.0
        %273 = vmatpush1.msra.mxu0 0.0
        %274 = vmatprep.subr.mxu0 0.0
        %275 = vmatpush1.msra.mxu0 0.0
        %276 = vmatprep.subr.mxu0 0.0
        %277 = vmatpush1.msra.mxu0 0.0
        %278 = vmatprep.subr.mxu0 0.0
        %279 = vmatpush1.msra.mxu0 0.0
        %280 = vmatprep.subr.mxu0 0.0
        %281 = vmatpush1.msra.mxu0 0.0
        %282 = vmatprep.subr.mxu0 0.0
        %283 = vmatpush1.msra.mxu0 0.0
        %284 = vmatprep.subr.mxu0 0.0
        %285 = vmatpush1.msra.mxu0 0.0
        %286 = vmatprep.subr.mxu0 0.0
        %287 = vmatpush1.msra.mxu0 0.0
        %288 = vmatprep.subr.mxu0 0.0
        %289 = vmatpush1.msra.mxu0 0.0
        %290 = vmatprep.subr.mxu0 0.0
        %291 = vmatpush1.msra.mxu0 0.0
        %292 = vmatprep.subr.mxu0 0.0
        %293 = vmatpush1.msra.mxu0 0.0
        %294 = vmatprep.subr.mxu0 0.0
        %295 = vmatpush1.msra.mxu0 0.0
        %296 = vmatprep.subr.mxu0 0.0
        %297 = vmatpush1.msra.mxu0 0.0
        %298 = vmatprep.subr.mxu0 0.0
        %299 = vmatpush1.msra.mxu0 0.0
        %300 = vmatprep.subr.mxu0 0.0
        %301 = vmatpush1.msra.mxu0 0.0
        %302 = vmatprep.subr.mxu0 0.0
        %303 = vmatpush1.msra.mxu0 0.0
        %304 = vmatprep.subr.mxu0 0.0
        %305 = vmatpush1.msra.mxu0 0.0
        %306 = vmatprep.subr.mxu0 0.0
        %307 = vmatpush1.msra.mxu0 0.0
        %308 = vmatprep.mubr.f32.mxu0 0.0
        %309 = vmatmul.mubr.f32.gmra.mrb[0].mxu0 %v233
        %v310 = vpop.f32.mrb[0].mxu0
        %v311 = vadd.f32 0.0, %v310
        %v312 = vpop.f32.mrb[0].mxu0
        %v313 = vadd.f32 0.0, %v312
        %314 = vmatprep.mubr.f32.mxu0 0.0
        %315 = vmatmul.mubr.f32.gmra.mrb[0].mxu0 %v236
        %v316 = vpop.f32.mrb[0].mxu0
        %v317 = vadd.f32 0.0, %v316
        %v318 = vpop.f32.mrb[0].mxu0
        %v319 = vadd.f32 0.0, %v318
        %320 = vmatprep.mubr.f32.mxu0 0.0
        %321 = vmatmul.mubr.f32.gmra.mrb[0].mxu0 %v239
        %v322 = vpop.f32.mrb[0].mxu0
        %v323 = vadd.f32 0.0, %v322
        %v324 = vpop.f32.mrb[0].mxu0
        %v325 = vadd.f32 0.0, %v324
        %326 = vmatprep.mubr.f32.mxu0 0.0
        %327 = vmatmul.mubr.f32.gmra.mrb[0].mxu0 %v242
        %v328 = vpop.f32.mrb[0].mxu0
        %v329 = vadd.f32 0.0, %v328
        %v330 = vpop.f32.mrb[0].mxu0
        %v331 = vadd.f32 0.0, %v330
        %332 = vdwg.mxu0
        %333 = vmatprep.subr.mxu0 0.0
        %334 = vmatpush1.msra.mxu0 %v227
        %335 = vmatprep.subr.mxu0 0.0
        %336 = vmatpush1.msra.mxu0 %v230
        %337 = vmatprep.subr.mxu0 0.0
        %338 = vmatpush1.msra.mxu0 0.0
        %339 = vmatprep.subr.mxu0 0.0
        %340 = vmatpush1.msra.mxu0 0.0
        %341 = vmatprep.subr.mxu0 0.0
        %342 = vmatpush1.msra.mxu0 0.0
        %343 = vmatprep.subr.mxu0 0.0
        %344 = vmatpush1.msra.mxu0 0.0
        %345 = vmatprep.subr.mxu0 0.0
        %346 = vmatpush1.msra.mxu0 0.0
        %347 = vmatprep.subr.mxu0 0.0
        %348 = vmatpush1.msra.mxu0 0.0
        %349 = vmatprep.subr.mxu0 0.0
        %350 = vmatpush1.msra.mxu0 0.0
        %351 = vmatprep.subr.mxu0 0.0
        %352 = vmatpush1.msra.mxu0 0.0
        %353 = vmatprep.subr.mxu0 0.0
        %354 = vmatpush1.msra.mxu0 0.0
        %355 = vmatprep.subr.mxu0 0.0
        %356 = vmatpush1.msra.mxu0 0.0
        %357 = vmatprep.subr.mxu0 0.0
        %358 = vmatpush1.msra.mxu0 0.0
        %359 = vmatprep.subr.mxu0 0.0
        %360 = vmatpush1.msra.mxu0 0.0
        %361 = vmatprep.subr.mxu0 0.0
        %362 = vmatpush1.msra.mxu0 0.0
        %363 = vmatprep.subr.mxu0 0.0
        %364 = vmatpush1.msra.mxu0 0.0
        %365 = vmatprep.subr.mxu0 0.0
        %366 = vmatpush1.msra.mxu0 0.0
        %367 = vmatprep.subr.mxu0 0.0
        %368 = vmatpush1.msra.mxu0 0.0
        %369 = vmatprep.subr.mxu0 0.0
        %370 = vmatpush1.msra.mxu0 0.0
        %371 = vmatprep.subr.mxu0 0.0
        %372 = vmatpush1.msra.mxu0 0.0
        %373 = vmatprep.subr.mxu0 0.0
        %374 = vmatpush1.msra.mxu0 0.0
        %375 = vmatprep.subr.mxu0 0.0
        %376 = vmatpush1.msra.mxu0 0.0
        %377 = vmatprep.subr.mxu0 0.0
        %378 = vmatpush1.msra.mxu0 0.0
        %379 = vmatprep.subr.mxu0 0.0
        %380 = vmatpush1.msra.mxu0 0.0
        %381 = vmatprep.subr.mxu0 0.0
        %382 = vmatpush1.msra.mxu0 0.0
        %383 = vmatprep.subr.mxu0 0.0
        %384 = vmatpush1.msra.mxu0 0.0
        %385 = vmatprep.subr.mxu0 0.0
        %386 = vmatpush1.msra.mxu0 0.0
        %387 = vmatprep.subr.mxu0 0.0
        %388 = vmatpush1.msra.mxu0 0.0
        %389 = vmatprep.subr.mxu0 0.0
        %390 = vmatpush1.msra.mxu0 0.0
        %391 = vmatprep.subr.mxu0 0.0
        %392 = vmatpush1.msra.mxu0 0.0
        %393 = vmatprep.subr.mxu0 0.0
        %394 = vmatpush1.msra.mxu0 0.0
        %395 = vmatprep.subr.mxu0 0.0
        %396 = vmatpush1.msra.mxu0 0.0
        %397 = vmatprep.mubr.f32.mxu0 0.0
        %398 = vmatmul.mubr.f32.gmra.mrb[0].mxu0 %v233
        %v399 = vpop.f32.mrb[0].mxu0
        %v400 = vadd.f32 0.0, %v399
        %v401 = vpop.f32.mrb[0].mxu0
        %402 = vmatprep.mubr.f32.mxu0 0.0
        %403 = vmatmul.mubr.f32.gmra.mrb[0].mxu0 %v236
        %v404 = vpop.f32.mrb[0].mxu0
        %v405 = vadd.f32 0.0, %v404
        %v406 = vpop.f32.mrb[0].mxu0
        %407 = vmatprep.mubr.f32.mxu0 0.0
        %408 = vmatmul.mubr.f32.gmra.mrb[0].mxu0 %v239
        %v409 = vpop.f32.mrb[0].mxu0
        %v410 = vadd.f32 0.0, %v409
        %v411 = vpop.f32.mrb[0].mxu0
        %412 = vmatprep.mubr.f32.mxu0 0.0
        %413 = vmatmul.mubr.f32.gmra.mrb[0].mxu0 %v242
        %v414 = vpop.f32.mrb[0].mxu0
        %v415 = vadd.f32 0.0, %v414
        %v416 = vpop.f32.mrb[0].mxu0
        %417 = vdwg.mxu0
        %v418 = vld [vmem:[%s2] sm:$0xff]
        %v419 = vld [vmem:[%s2 + $0x8] sm:$0xff]
        %v420 = vld [vmem:[%s2 + $0x10] sm:$0xff]
        %v421 = vld [vmem:[%s2 + $0x18] sm:$0xff]
        %v422 = vld [vmem:[%s2 + $0x20] sm:$0xff]
        %v423 = vld [vmem:[%s2 + $0x28] sm:$0xff]
        %v424 = vld [vmem:[%s2 + $0x30] sm:$0xff]
        %v425 = vld [vmem:[%s2 + $0x38] sm:$0xff]
        %s426 = scalar_lea.vmem %s2, 64
        %v427 = vld [vmem:[%s426] sm:$0xff]
        %v428 = vld [vmem:[%s426 + $0x8] sm:$0xff]
        %v429 = vld [vmem:[%s426 + $0x10] sm:$0xff]
        %v430 = vld [vmem:[%s426 + $0x18] sm:$0xff]
        %v431 = vld [vmem:[%s426 + $0x20] sm:$0xff]
        %v432 = vld [vmem:[%s426 + $0x28] sm:$0xff]
        %v433 = vld [vmem:[%s426 + $0x30] sm:$0xff]
        %v434 = vld [vmem:[%s426 + $0x38] sm:$0xff]
        %vm435 = vcmask 261120
        %v437 = vsel %vm435, %v427, 0
        %v440 = vsel %vm435, %v428, 0
        %v443 = vsel %vm435, %v429, 0
        %v446 = vsel %vm435, %v430, 0
        %v449 = vsel %vm435, %v431, 0
        %v452 = vsel %vm435, %v432, 0
        %v455 = vsel %vm435, %v433, 0
        %v458 = vsel %vm435, %v434, 0
        %460 = vmatprep.subr.mxu0 0.0
        %461 = vmatpush1.msra.mxu0 %v313
        %462 = vmatprep.subr.mxu0 0.0
        %463 = vmatpush1.msra.mxu0 %v319
        %464 = vmatprep.subr.mxu0 0.0
        %465 = vmatpush1.msra.mxu0 %v325
        %466 = vmatprep.subr.mxu0 0.0
        %467 = vmatpush1.msra.mxu0 %v331
        %468 = vmatprep.subr.mxu0 0.0
        %469 = vmatpush1.msra.mxu0 0.0
        %470 = vmatprep.subr.mxu0 0.0
        %471 = vmatpush1.msra.mxu0 0.0
        %472 = vmatprep.subr.mxu0 0.0
        %473 = vmatpush1.msra.mxu0 0.0
        %474 = vmatprep.subr.mxu0 0.0
        %475 = vmatpush1.msra.mxu0 0.0
        %476 = vmatprep.subr.mxu0 0.0
        %477 = vmatpush1.msra.mxu0 0.0
        %478 = vmatprep.subr.mxu0 0.0
        %479 = vmatpush1.msra.mxu0 0.0
        %480 = vmatprep.subr.mxu0 0.0
        %481 = vmatpush1.msra.mxu0 0.0
        %482 = vmatprep.subr.mxu0 0.0
        %483 = vmatpush1.msra.mxu0 0.0
        %484 = vmatprep.subr.mxu0 0.0
        %485 = vmatpush1.msra.mxu0 0.0
        %486 = vmatprep.subr.mxu0 0.0
        %487 = vmatpush1.msra.mxu0 0.0
        %488 = vmatprep.subr.mxu0 0.0
        %489 = vmatpush1.msra.mxu0 0.0
        %490 = vmatprep.subr.mxu0 0.0
        %491 = vmatpush1.msra.mxu0 0.0
        %492 = vmatprep.subr.mxu0 0.0
        %493 = vmatpush1.msra.mxu0 0.0
        %494 = vmatprep.subr.mxu0 0.0
        %495 = vmatpush1.msra.mxu0 0.0
        %496 = vmatprep.subr.mxu0 0.0
        %497 = vmatpush1.msra.mxu0 0.0
        %498 = vmatprep.subr.mxu0 0.0
        %499 = vmatpush1.msra.mxu0 0.0
        %500 = vmatprep.subr.mxu0 0.0
        %501 = vmatpush1.msra.mxu0 0.0
        %502 = vmatprep.subr.mxu0 0.0
        %503 = vmatpush1.msra.mxu0 0.0
        %504 = vmatprep.subr.mxu0 0.0
        %505 = vmatpush1.msra.mxu0 0.0
        %506 = vmatprep.subr.mxu0 0.0
        %507 = vmatpush1.msra.mxu0 0.0
        %508 = vmatprep.subr.mxu0 0.0
        %509 = vmatpush1.msra.mxu0 0.0
        %510 = vmatprep.subr.mxu0 0.0
        %511 = vmatpush1.msra.mxu0 0.0
        %512 = vmatprep.subr.mxu0 0.0
        %513 = vmatpush1.msra.mxu0 0.0
        %514 = vmatprep.subr.mxu0 0.0
        %515 = vmatpush1.msra.mxu0 0.0
        %516 = vmatprep.subr.mxu0 0.0
        %517 = vmatpush1.msra.mxu0 0.0
        %518 = vmatprep.subr.mxu0 0.0
        %519 = vmatpush1.msra.mxu0 0.0
        %520 = vmatprep.subr.mxu0 0.0
        %521 = vmatpush1.msra.mxu0 0.0
        %522 = vmatprep.subr.mxu0 0.0
        %523 = vmatpush1.msra.mxu0 0.0
        %524 = vmatprep.mubr.f32.mxu0 0.0
        %525 = vmatmul.mubr.f32.gmra.mrb[0].mxu0 %v437
        %v526 = vpop.f32.mrb[0].mxu0
        %v527 = vadd.f32 0.0, %v526
        %v528 = vpop.f32.mrb[0].mxu0
        %529 = vmatprep.mubr.f32.mxu0 0.0
        %530 = vmatmul.mubr.f32.gmra.mrb[0].mxu0 %v440
        %v531 = vpop.f32.mrb[0].mxu0
        %v532 = vadd.f32 0.0, %v531
        %v533 = vpop.f32.mrb[0].mxu0
        %534 = vmatprep.mubr.f32.mxu0 0.0
        %535 = vmatmul.mubr.f32.gmra.mrb[0].mxu0 %v443
        %v536 = vpop.f32.mrb[0].mxu0
        %v537 = vadd.f32 0.0, %v536
        %v538 = vpop.f32.mrb[0].mxu0
        %539 = vmatprep.mubr.f32.mxu0 0.0
        %540 = vmatmul.mubr.f32.gmra.mrb[0].mxu0 %v446
        %v541 = vpop.f32.mrb[0].mxu0
        %v542 = vadd.f32 0.0, %v541
        %v543 = vpop.f32.mrb[0].mxu0
        %544 = vmatprep.mubr.f32.mxu0 0.0
        %545 = vmatmul.mubr.f32.gmra.mrb[0].mxu0 %v449
        %v546 = vpop.f32.mrb[0].mxu0
        %v547 = vadd.f32 0.0, %v546
        %v548 = vpop.f32.mrb[0].mxu0
        %549 = vmatprep.mubr.f32.mxu0 0.0
        %550 = vmatmul.mubr.f32.gmra.mrb[0].mxu0 %v452
        %v551 = vpop.f32.mrb[0].mxu0
        %v552 = vadd.f32 0.0, %v551
        %v553 = vpop.f32.mrb[0].mxu0
        %554 = vmatprep.mubr.f32.mxu0 0.0
        %555 = vmatmul.mubr.f32.gmra.mrb[0].mxu0 %v455
        %v556 = vpop.f32.mrb[0].mxu0
        %v557 = vadd.f32 0.0, %v556
        %v558 = vpop.f32.mrb[0].mxu0
        %559 = vmatprep.mubr.f32.mxu0 0.0
        %560 = vmatmul.mubr.f32.gmra.mrb[0].mxu0 %v458
        %v561 = vpop.f32.mrb[0].mxu0
        %v562 = vadd.f32 0.0, %v561
        %v563 = vpop.f32.mrb[0].mxu0
        %564 = vdwg.mxu0
        %v566 = vsel %vm435, %v418, 0
        %v569 = vsel %vm435, %v419, 0
        %v572 = vsel %vm435, %v420, 0
        %v575 = vsel %vm435, %v421, 0
        %v578 = vsel %vm435, %v422, 0
        %v581 = vsel %vm435, %v423, 0
        %v584 = vsel %vm435, %v424, 0
        %v587 = vsel %vm435, %v425, 0
        %589 = vmatprep.subr.mxu0 0.0
        %590 = vmatpush1.msra.mxu0 %v311
        %591 = vmatprep.subr.mxu0 0.0
        %592 = vmatpush1.msra.mxu0 %v317
        %593 = vmatprep.subr.mxu0 0.0
        %594 = vmatpush1.msra.mxu0 %v323
        %595 = vmatprep.subr.mxu0 0.0
        %596 = vmatpush1.msra.mxu0 %v329
        %597 = vmatprep.subr.mxu0 0.0
        %598 = vmatpush1.msra.mxu0 0.0
        %599 = vmatprep.subr.mxu0 0.0
        %600 = vmatpush1.msra.mxu0 0.0
        %601 = vmatprep.subr.mxu0 0.0
        %602 = vmatpush1.msra.mxu0 0.0
        %603 = vmatprep.subr.mxu0 0.0
        %604 = vmatpush1.msra.mxu0 0.0
        %605 = vmatprep.subr.mxu0 0.0
        %606 = vmatpush1.msra.mxu0 0.0
        %607 = vmatprep.subr.mxu0 0.0
        %608 = vmatpush1.msra.mxu0 0.0
        %609 = vmatprep.subr.mxu0 0.0
        %610 = vmatpush1.msra.mxu0 0.0
        %611 = vmatprep.subr.mxu0 0.0
        %612 = vmatpush1.msra.mxu0 0.0
        %613 = vmatprep.subr.mxu0 0.0
        %614 = vmatpush1.msra.mxu0 0.0
        %615 = vmatprep.subr.mxu0 0.0
        %616 = vmatpush1.msra.mxu0 0.0
        %617 = vmatprep.subr.mxu0 0.0
        %618 = vmatpush1.msra.mxu0 0.0
        %619 = vmatprep.subr.mxu0 0.0
        %620 = vmatpush1.msra.mxu0 0.0
        %621 = vmatprep.subr.mxu0 0.0
        %622 = vmatpush1.msra.mxu0 0.0
        %623 = vmatprep.subr.mxu0 0.0
        %624 = vmatpush1.msra.mxu0 0.0
        %625 = vmatprep.subr.mxu0 0.0
        %626 = vmatpush1.msra.mxu0 0.0
        %627 = vmatprep.subr.mxu0 0.0
        %628 = vmatpush1.msra.mxu0 0.0
        %629 = vmatprep.subr.mxu0 0.0
        %630 = vmatpush1.msra.mxu0 0.0
        %631 = vmatprep.subr.mxu0 0.0
        %632 = vmatpush1.msra.mxu0 0.0
        %633 = vmatprep.subr.mxu0 0.0
        %634 = vmatpush1.msra.mxu0 0.0
        %635 = vmatprep.subr.mxu0 0.0
        %636 = vmatpush1.msra.mxu0 0.0
        %637 = vmatprep.subr.mxu0 0.0
        %638 = vmatpush1.msra.mxu0 0.0
        %639 = vmatprep.subr.mxu0 0.0
        %640 = vmatpush1.msra.mxu0 0.0
        %641 = vmatprep.subr.mxu0 0.0
        %642 = vmatpush1.msra.mxu0 0.0
        %643 = vmatprep.subr.mxu0 0.0
        %644 = vmatpush1.msra.mxu0 0.0
        %645 = vmatprep.subr.mxu0 0.0
        %646 = vmatpush1.msra.mxu0 0.0
        %647 = vmatprep.subr.mxu0 0.0
        %648 = vmatpush1.msra.mxu0 0.0
        %649 = vmatprep.subr.mxu0 0.0
        %650 = vmatpush1.msra.mxu0 0.0
        %651 = vmatprep.subr.mxu0 0.0
        %652 = vmatpush1.msra.mxu0 0.0
        %653 = vmatprep.mubr.f32.mxu0 0.0
        %654 = vmatmul.mubr.f32.gmra.mrb[0].mxu0 %v566
        %v655 = vpop.f32.mrb[0].mxu0
        %v656 = vadd.f32 %v527, %v655
        %v657 = vpop.f32.mrb[0].mxu0
        %658 = vmatprep.mubr.f32.mxu0 0.0
        %659 = vmatmul.mubr.f32.gmra.mrb[0].mxu0 %v569
        %v660 = vpop.f32.mrb[0].mxu0
        %v661 = vadd.f32 %v532, %v660
        %v662 = vpop.f32.mrb[0].mxu0
        %663 = vmatprep.mubr.f32.mxu0 0.0
        %664 = vmatmul.mubr.f32.gmra.mrb[0].mxu0 %v572
        %v665 = vpop.f32.mrb[0].mxu0
        %v666 = vadd.f32 %v537, %v665
        %v667 = vpop.f32.mrb[0].mxu0
        %668 = vmatprep.mubr.f32.mxu0 0.0
        %669 = vmatmul.mubr.f32.gmra.mrb[0].mxu0 %v575
        %v670 = vpop.f32.mrb[0].mxu0
        %v671 = vadd.f32 %v542, %v670
        %v672 = vpop.f32.mrb[0].mxu0
        %673 = vmatprep.mubr.f32.mxu0 0.0
        %674 = vmatmul.mubr.f32.gmra.mrb[0].mxu0 %v578
        %v675 = vpop.f32.mrb[0].mxu0
        %v676 = vadd.f32 %v547, %v675
        %v677 = vpop.f32.mrb[0].mxu0
        %678 = vmatprep.mubr.f32.mxu0 0.0
        %679 = vmatmul.mubr.f32.gmra.mrb[0].mxu0 %v581
        %v680 = vpop.f32.mrb[0].mxu0
        %v681 = vadd.f32 %v552, %v680
        %v682 = vpop.f32.mrb[0].mxu0
        %683 = vmatprep.mubr.f32.mxu0 0.0
        %684 = vmatmul.mubr.f32.gmra.mrb[0].mxu0 %v584
        %v685 = vpop.f32.mrb[0].mxu0
        %v686 = vadd.f32 %v557, %v685
        %v687 = vpop.f32.mrb[0].mxu0
        %688 = vmatprep.mubr.f32.mxu0 0.0
        %689 = vmatmul.mubr.f32.gmra.mrb[0].mxu0 %v587
        %v690 = vpop.f32.mrb[0].mxu0
        %v691 = vadd.f32 %v562, %v690
        %v692 = vpop.f32.mrb[0].mxu0
        %693 = vdwg.mxu0
        %s694 = scalar_lea.vmem %s2, 128
        %v695 = vld [vmem:[%s694] sm:$0xff]
        %v696 = vld [vmem:[%s694 + $0x8] sm:$0xff]
        %v697 = vld [vmem:[%s694 + $0x10] sm:$0xff]
        %v698 = vld [vmem:[%s694 + $0x18] sm:$0xff]
        %v699 = vld [vmem:[%s694 + $0x20] sm:$0xff]
        %v700 = vld [vmem:[%s694 + $0x28] sm:$0xff]
        %v701 = vld [vmem:[%s694 + $0x30] sm:$0xff]
        %v702 = vld [vmem:[%s694 + $0x38] sm:$0xff]
        %v704 = vsel %vm435, %v695, 0
        %v707 = vsel %vm435, %v696, 0
        %v710 = vsel %vm435, %v697, 0
        %v713 = vsel %vm435, %v698, 0
        %v716 = vsel %vm435, %v699, 0
        %v719 = vsel %vm435, %v700, 0
        %v722 = vsel %vm435, %v701, 0
        %v725 = vsel %vm435, %v702, 0
        %727 = vmatprep.subr.mxu0 0.0
        %728 = vmatpush1.msra.mxu0 %v400
        %729 = vmatprep.subr.mxu0 0.0
        %730 = vmatpush1.msra.mxu0 %v405
        %731 = vmatprep.subr.mxu0 0.0
        %732 = vmatpush1.msra.mxu0 %v410
        %733 = vmatprep.subr.mxu0 0.0
        %734 = vmatpush1.msra.mxu0 %v415
        %735 = vmatprep.subr.mxu0 0.0
        %736 = vmatpush1.msra.mxu0 0.0
        %737 = vmatprep.subr.mxu0 0.0
        %738 = vmatpush1.msra.mxu0 0.0
        %739 = vmatprep.subr.mxu0 0.0
        %740 = vmatpush1.msra.mxu0 0.0
        %741 = vmatprep.subr.mxu0 0.0
        %742 = vmatpush1.msra.mxu0 0.0
        %743 = vmatprep.subr.mxu0 0.0
        %744 = vmatpush1.msra.mxu0 0.0
        %745 = vmatprep.subr.mxu0 0.0
        %746 = vmatpush1.msra.mxu0 0.0
        %747 = vmatprep.subr.mxu0 0.0
        %748 = vmatpush1.msra.mxu0 0.0
        %749 = vmatprep.subr.mxu0 0.0
        %750 = vmatpush1.msra.mxu0 0.0
        %751 = vmatprep.subr.mxu0 0.0
        %752 = vmatpush1.msra.mxu0 0.0
        %753 = vmatprep.subr.mxu0 0.0
        %754 = vmatpush1.msra.mxu0 0.0
        %755 = vmatprep.subr.mxu0 0.0
        %756 = vmatpush1.msra.mxu0 0.0
        %757 = vmatprep.subr.mxu0 0.0
        %758 = vmatpush1.msra.mxu0 0.0
        %759 = vmatprep.subr.mxu0 0.0
        %760 = vmatpush1.msra.mxu0 0.0
        %761 = vmatprep.subr.mxu0 0.0
        %762 = vmatpush1.msra.mxu0 0.0
        %763 = vmatprep.subr.mxu0 0.0
        %764 = vmatpush1.msra.mxu0 0.0
        %765 = vmatprep.subr.mxu0 0.0
        %766 = vmatpush1.msra.mxu0 0.0
        %767 = vmatprep.subr.mxu0 0.0
        %768 = vmatpush1.msra.mxu0 0.0
        %769 = vmatprep.subr.mxu0 0.0
        %770 = vmatpush1.msra.mxu0 0.0
        %771 = vmatprep.subr.mxu0 0.0
        %772 = vmatpush1.msra.mxu0 0.0
        %773 = vmatprep.subr.mxu0 0.0
        %774 = vmatpush1.msra.mxu0 0.0
        %775 = vmatprep.subr.mxu0 0.0
        %776 = vmatpush1.msra.mxu0 0.0
        %777 = vmatprep.subr.mxu0 0.0
        %778 = vmatpush1.msra.mxu0 0.0
        %779 = vmatprep.subr.mxu0 0.0
        %780 = vmatpush1.msra.mxu0 0.0
        %781 = vmatprep.subr.mxu0 0.0
        %782 = vmatpush1.msra.mxu0 0.0
        %783 = vmatprep.subr.mxu0 0.0
        %784 = vmatpush1.msra.mxu0 0.0
        %785 = vmatprep.subr.mxu0 0.0
        %786 = vmatpush1.msra.mxu0 0.0
        %787 = vmatprep.subr.mxu0 0.0
        %788 = vmatpush1.msra.mxu0 0.0
        %789 = vmatprep.subr.mxu0 0.0
        %790 = vmatpush1.msra.mxu0 0.0
        %791 = vmatprep.mubr.f32.mxu0 0.0
        %792 = vmatmul.mubr.f32.gmra.mrb[0].mxu0 %v704
        %v793 = vpop.f32.mrb[0].mxu0
        %v794 = vadd.f32 0.0, %v793
        %v795 = vpop.f32.mrb[0].mxu0
        %796 = vmatprep.mubr.f32.mxu0 0.0
        %797 = vmatmul.mubr.f32.gmra.mrb[0].mxu0 %v707
        %v798 = vpop.f32.mrb[0].mxu0
        %v799 = vadd.f32 0.0, %v798
        %v800 = vpop.f32.mrb[0].mxu0
        %801 = vmatprep.mubr.f32.mxu0 0.0
        %802 = vmatmul.mubr.f32.gmra.mrb[0].mxu0 %v710
        %v803 = vpop.f32.mrb[0].mxu0
        %v804 = vadd.f32 0.0, %v803
        %v805 = vpop.f32.mrb[0].mxu0
        %806 = vmatprep.mubr.f32.mxu0 0.0
        %807 = vmatmul.mubr.f32.gmra.mrb[0].mxu0 %v713
        %v808 = vpop.f32.mrb[0].mxu0
        %v809 = vadd.f32 0.0, %v808
        %v810 = vpop.f32.mrb[0].mxu0
        %811 = vmatprep.mubr.f32.mxu0 0.0
        %812 = vmatmul.mubr.f32.gmra.mrb[0].mxu0 %v716
        %v813 = vpop.f32.mrb[0].mxu0
        %v814 = vadd.f32 0.0, %v813
        %v815 = vpop.f32.mrb[0].mxu0
        %816 = vmatprep.mubr.f32.mxu0 0.0
        %817 = vmatmul.mubr.f32.gmra.mrb[0].mxu0 %v719
        %v818 = vpop.f32.mrb[0].mxu0
        %v819 = vadd.f32 0.0, %v818
        %v820 = vpop.f32.mrb[0].mxu0
        %821 = vmatprep.mubr.f32.mxu0 0.0
        %822 = vmatmul.mubr.f32.gmra.mrb[0].mxu0 %v722
        %v823 = vpop.f32.mrb[0].mxu0
        %v824 = vadd.f32 0.0, %v823
        %v825 = vpop.f32.mrb[0].mxu0
        %826 = vmatprep.mubr.f32.mxu0 0.0
        %827 = vmatmul.mubr.f32.gmra.mrb[0].mxu0 %v725
        %v828 = vpop.f32.mrb[0].mxu0
        %v829 = vadd.f32 0.0, %v828
        %v830 = vpop.f32.mrb[0].mxu0
        %831 = vdwg.mxu0
        %v832 = vadd.f32 %v656, %v794
        %v833 = vadd.f32 %v661, %v799
        %v834 = vadd.f32 %v666, %v804
        %v835 = vadd.f32 %v671, %v809
        %v836 = vadd.f32 %v676, %v814
        %v837 = vadd.f32 %v681, %v819
        %v838 = vadd.f32 %v686, %v824
        %v839 = vadd.f32 %v691, %v829
        %v840 = vld [vmem:[%s3] sm:$0x1]
        %v841 = vld [vmem:[%s3 + $0x1] sm:$0x1]
        %v842 = vld [vmem:[%s3 + $0x2] sm:$0x1]
        %v843 = vld [vmem:[%s3 + $0x3] sm:$0x1]
        %v844 = vld [vmem:[%s3 + $0x4] sm:$0x1]
        %v845 = vld [vmem:[%s3 + $0x5] sm:$0x1]
        %v846 = vld [vmem:[%s3 + $0x6] sm:$0x1]
        %v847 = vld [vmem:[%s3 + $0x7] sm:$0x1]
        %v856 = vlaneseq
        %v857 = vshrl.u32 %v856, 7
        %v858 = vsub.s32 0, %v857
        %v859 = vrot.slane %v840, %v858
        %v860 = vlaneseq
        %v861 = vshrl.u32 %v860, 7
        %v862 = vsub.s32 0, %v861
        %v863 = vrot.slane %v841, %v862
        %v864 = vlaneseq
        %v865 = vshrl.u32 %v864, 7
        %v866 = vsub.s32 0, %v865
        %v867 = vrot.slane %v842, %v866
        %v868 = vlaneseq
        %v869 = vshrl.u32 %v868, 7
        %v870 = vsub.s32 0, %v869
        %v871 = vrot.slane %v843, %v870
        %v872 = vlaneseq
        %v873 = vshrl.u32 %v872, 7
        %v874 = vsub.s32 0, %v873
        %v875 = vrot.slane %v844, %v874
        %v876 = vlaneseq
        %v877 = vshrl.u32 %v876, 7
        %v878 = vsub.s32 0, %v877
        %v879 = vrot.slane %v845, %v878
        %v880 = vlaneseq
        %v881 = vshrl.u32 %v880, 7
        %v882 = vsub.s32 0, %v881
        %v883 = vrot.slane %v846, %v882
        %v884 = vlaneseq
        %v885 = vshrl.u32 %v884, 7
        %v886 = vsub.s32 0, %v885
        %v887 = vrot.slane %v847, %v886
        %888 = vset.pattern.permute.xlu0 0
        %889 = vperm.xlu0 %888, %v859
        %v890 = vpop.permute.xlu0 %889
        %892 = vset.pattern.permute.xlu0 0
        %893 = vperm.xlu0 %892, %v863
        %v894 = vpop.permute.xlu0 %893
        %896 = vset.pattern.permute.xlu0 0
        %897 = vperm.xlu0 %896, %v867
        %v898 = vpop.permute.xlu0 %897
        %900 = vset.pattern.permute.xlu0 0
        %901 = vperm.xlu0 %900, %v871
        %v902 = vpop.permute.xlu0 %901
        %904 = vset.pattern.permute.xlu0 0
        %905 = vperm.xlu0 %904, %v875
        %v906 = vpop.permute.xlu0 %905
        %908 = vset.pattern.permute.xlu0 0
        %909 = vperm.xlu0 %908, %v879
        %v910 = vpop.permute.xlu0 %909
        %912 = vset.pattern.permute.xlu0 0
        %913 = vperm.xlu0 %912, %v883
        %v914 = vpop.permute.xlu0 %913
        %916 = vset.pattern.permute.xlu0 0
        %917 = vperm.xlu0 %916, %v887
        %v918 = vpop.permute.xlu0 %917
        %v920 = vadd.f32 %v832, %v890
        %v921 = vadd.f32 %v833, %v894
        %v922 = vadd.f32 %v834, %v898
        %v923 = vadd.f32 %v835, %v902
        %v924 = vadd.f32 %v836, %v906
        %v925 = vadd.f32 %v837, %v910
        %v926 = vadd.f32 %v838, %v914
        %v927 = vadd.f32 %v839, %v918
        %928 = vst.msk [vmem:[%s212] sm:$0xff] %vm231, %v920
        %929 = vst.msk [vmem:[%s212 + $0x8] sm:$0xff] %vm231, %v921
        %930 = vst.msk [vmem:[%s212 + $0x10] sm:$0xff] %vm231, %v922
        %931 = vst.msk [vmem:[%s212 + $0x18] sm:$0xff] %vm231, %v923
        %932 = vst.msk [vmem:[%s212 + $0x20] sm:$0xff] %vm231, %v924
        %933 = vst.msk [vmem:[%s212 + $0x28] sm:$0xff] %vm231, %v925
        %934 = vst.msk [vmem:[%s212 + $0x30] sm:$0xff] %vm231, %v926
        %935 = vst.msk [vmem:[%s212 + $0x38] sm:$0xff] %vm231, %v927
        %s936 = sand.u32 %s131, 1
        %s937 = scalar_lea.sflag [#allocation3], %s936
        %s938 = sand.u32 %s131, 1
        %s939 = smul.addr %s938, 64
        %s940 = scalar_lea.vmem [#allocation2], %s939
        // Predicated region
        $region37: #{tpu_custom_call.1} parent=35 // pred_check
          %p941 = pneg %p141
        $region38: #{tpu_custom_call.1} parent=35 // pred_check_branch
          %943 = sbr.rel (%p941) target = $region40
        $region39: #{tpu_custom_call.1} parent=35 // pred_region
          %s945 = ssub.s32 1024, 1024
          %946 = vsyncadd %s937, %s945
          %s947 = smul.addr %s22, 8
          %s948 = sadd.s32 %s23, %s947
          %s949 = smul.addr %s948, 128
          %s950 = scalar_lea.hbm %s4, %s949
          %s951 = sshll.u32 %s940, 4
          %s952 = int_to_ptr.vmem [resolvable:$true] %s951
          %957 = dma.vmem_to_hbm [thread:$0]  %s952, 1024, %s950, %s937, 128, 128, 8
        $region40: #{tpu_custom_call.1} parent=35 // pred_fallthru
          _
      $region36: #{tpu_custom_call.1} parent=5 // pred_fallthru
        _
      %p958 = scmp.le.s32.totalorder 2, %s13
      // Predicated region
      $region41: #{tpu_custom_call.1} parent=5 // pred_check
        %p959 = pneg %p958
      $region42: #{tpu_custom_call.1} parent=5 // pred_check_branch
        %961 = sbr.rel (%p959) target = $region44
      $region43: #{tpu_custom_call.1} parent=5 // pred_region
        %s962 = ssub.s32 %s13, 2
        // Predicated region
        $region45: #{tpu_custom_call.1} parent=43 // pred_check
          %p963 = pneg %p147
        $region46: #{tpu_custom_call.1} parent=43 // pred_check_branch
          %965 = sbr.rel (%p963) target = $region48
        $region47: #{tpu_custom_call.1} parent=43 // pred_region
          %s966 = sand.u32 %s132, 1
          %s967 = scalar_lea.sflag [#allocation3], %s966
          %s968 = sand.u32 %s132, 1
          %s969 = smul.addr %s968, 64
          %s970 = scalar_lea.vmem [#allocation2], %s969
          %971 = dma.done %s967, 1024
        $region48: #{tpu_custom_call.1} parent=43 // pred_fallthru
          _
      $region44: #{tpu_custom_call.1} parent=5 // pred_fallthru
        _
    $region6: #{tpu_custom_call.1} parent=1 // loop_footer
      %s17 = sadd.s32 1, %s13
    $region7: #{tpu_custom_call.1} parent=1 // loop_footer_branch
      %12 = sbr.rel target = $region3
    $region8: #{tpu_custom_call.1} parent=1 // loop_exit
      _
    %972 = vsyncpa [#allocation3], 1
    %s973 = scalar_lea.sflag [#allocation3], 1
    %974 = vsyncpa %s973, 1

</llo_original>
